<compile_context>
chip_gen: v6e
topology: v6e:2x2x1
jax: 0.10.0
libtpu: 0.0.40
codegen_flags: <defaults>
</compile_context>

<pallas_src>
import functools

import jax
import jax.numpy as jnp
from jax.experimental import pallas as pl
from jax.experimental.pallas import tpu as pltpu


def _round_up(x, m):
    return ((x + m - 1) // m) * m


def _mlp_kernel(traj_ref, ctx_ref,
                w1t_ref, w1c_ref, b1_ref,
                w2_ref, b2_ref,
                w3_ref, b3_ref,
                o_ref):
    # Layer 1: concat-matmul via split weight, bias, ReLU (f32 accumulate).
    h = (jnp.dot(traj_ref[...], w1t_ref[...], preferred_element_type=jnp.float32)
         + jnp.dot(ctx_ref[...], w1c_ref[...], preferred_element_type=jnp.float32)
         + b1_ref[...])
    h = jnp.maximum(h, 0.0).astype(w2_ref.dtype)
    # Layer 2: Linear + ReLU.
    h = jnp.dot(h, w2_ref[...], preferred_element_type=jnp.float32) + b2_ref[...]
    h = jnp.maximum(h, 0.0).astype(w3_ref.dtype)
    # Output layer: Linear (no activation), stored as f32.
    o_ref[...] = (jnp.dot(h, w3_ref[...], preferred_element_type=jnp.float32)
                  + b3_ref[...]).astype(o_ref.dtype)


@functools.partial(jax.jit, static_argnames=("block_b", "compute_dtype"))
def conditional_mlp_pallas(trajectory, context, params, *,
                           block_b=1024, compute_dtype=jnp.float32):
    """trajectory: (B, Dt), context: (B, Dc) -> (B, output_dim) float32."""
    w1, b1, w2, b2, w3, b3 = params
    B, Dt = trajectory.shape
    Dc = context.shape[1]
    out_dim = w3.shape[1]

    # Split first-layer weight along its input axis (trajectory / context part).
    w1t = w1[:Dt, :].astype(compute_dtype)
    w1c = w1[Dt:, :].astype(compute_dtype)
    w2c = w2.astype(compute_dtype)
    w3c = w3.astype(compute_dtype)
    # Biases as (1, H) 2-D rows, kept in f32 (added to the f32 accumulators).
    b1r = b1.reshape(1, -1).astype(jnp.float32)
    b2r = b2.reshape(1, -1).astype(jnp.float32)
    b3r = b3.reshape(1, -1).astype(jnp.float32)

    traj = trajectory.astype(compute_dtype)
    ctx = context.astype(compute_dtype)

    # Batch tile: large multiple of 8 (sublane), clipped for tiny batches.
    tb = _round_up(min(block_b, _round_up(B, 8)), 8)
    n_blocks = pl.cdiv(B, tb)
    b_pad = n_blocks * tb
    if b_pad != B:
        # Pad the tail tile; padded rows produce garbage and are sliced off.
        traj = jnp.pad(traj, ((0, b_pad - B), (0, 0)))
        ctx = jnp.pad(ctx, ((0, b_pad - B), (0, 0)))

    def row_spec(d):
        return pl.BlockSpec((tb, d), lambda i: (i, 0))

    def const_spec(arr):
        return pl.BlockSpec(arr.shape, lambda i: (0, 0))

    out = pl.pallas_call(
        _mlp_kernel,
        out_shape=jax.ShapeDtypeStruct((b_pad, out_dim), jnp.float32),
        grid=(n_blocks,),
        in_specs=[
            row_spec(Dt),            # trajectory tile   (tb, Dt)
            row_spec(Dc),            # context tile      (tb, Dc)
            const_spec(w1t),         # W1 trajectory part (resident)
            const_spec(w1c),         # W1 context part    (resident)
            const_spec(b1r),
            const_spec(w2c),
            const_spec(b2r),
            const_spec(w3c),
            const_spec(b3r),
        ],
        out_specs=row_spec(out_dim),
        compiler_params=pltpu.CompilerParams(
            dimension_semantics=("parallel",)),
    )(traj, ctx, w1t, w1c, b1r, w2c, b2r, w3c, b3r)

    return out[:B]


def init_params(key, trajectory_dim, context_dim, output_dim, hidden_units=(64, 64)):
    """Deterministic synthetic params; weights stored as (in, out)."""
    dims = [trajectory_dim + context_dim, *hidden_units, output_dim]
    params = []
    keys = jax.random.split(key, 2 * (len(dims) - 1))
    for i in range(len(dims) - 1):
        fan_in = dims[i]
        bound = 1.0 / (fan_in ** 0.5)
        w = jax.random.uniform(keys[2 * i], (dims[i], dims[i + 1]),
                               minval=-bound, maxval=bound, dtype=jnp.float32)
        b = jax.random.uniform(keys[2 * i + 1], (dims[i + 1],),
                               minval=-bound, maxval=bound, dtype=jnp.float32)
        params += [w, b]
    return tuple(params)


def conditional_mlp_ref(trajectory, context, params, compute_dtype=jnp.float32):
    """Pure-JAX reference (matches PyTorch forward; optional bf16 compute)."""
    w1, b1, w2, b2, w3, b3 = params
    x = jnp.concatenate([trajectory, context], axis=-1).astype(compute_dtype)
    h = jnp.dot(x, w1.astype(compute_dtype),
                preferred_element_type=jnp.float32) + b1
    h = jnp.maximum(h, 0.0).astype(compute_dtype)
    h = jnp.dot(h, w2.astype(compute_dtype),
                preferred_element_type=jnp.float32) + b2
    h = jnp.maximum(h, 0.0).astype(compute_dtype)
    return jnp.dot(h, w3.astype(compute_dtype),
                   preferred_element_type=jnp.float32) + b3


if __name__ == "__main__":
    trajectory_dim = 16
    context_dim = 8
    output_dim = 32

    key = jax.random.PRNGKey(0)
    k_params, k_traj, k_ctx = jax.random.split(key, 3)
    params = init_params(k_params, trajectory_dim, context_dim, output_dim,
                         hidden_units=(64, 64))

    # --- small batch (module-scale demo): f32, tight tolerance -------------
    B_small = 8
    traj_s = jax.random.normal(k_traj, (B_small, trajectory_dim), dtype=jnp.float32)
    ctx_s = jax.random.normal(k_ctx, (B_small, context_dim), dtype=jnp.float32)

    out_s = jax.block_until_ready(conditional_mlp_pallas(traj_s, ctx_s, params))
    ref_s = conditional_mlp_ref(traj_s, ctx_s, params)
    assert out_s.shape == (B_small, output_dim)
    assert jnp.allclose(out_s, ref_s, atol=1e-5, rtol=1e-5), "f32 small-batch mismatch"

    # --- larger batch with a ragged tail: exercises the batch grid + padding
    B_big = 4000  # not a multiple of the 1024-row tile -> padded tail tile
    k_tb, k_cb = jax.random.split(jax.random.PRNGKey(1))
    traj_b = jax.random.normal(k_tb, (B_big, trajectory_dim), dtype=jnp.float32)
    ctx_b = jax.random.normal(k_cb, (B_big, context_dim), dtype=jnp.float32)

    out_b = jax.block_until_ready(
        conditional_mlp_pallas(traj_b, ctx_b, params, block_b=1024))
    ref_b = conditional_mlp_ref(traj_b, ctx_b, params)
    assert out_b.shape == (B_big, output_dim)
    assert jnp.allclose(out_b, ref_b, atol=1e-4, rtol=1e-4), "f32 big-batch mismatch"

    # --- bf16 weights/activations with f32 accumulation (perf path) --------
    out_bf16 = jax.block_until_ready(
        conditional_mlp_pallas(traj_b, ctx_b, params,
                               block_b=1024, compute_dtype=jnp.bfloat16))
    ref_bf16 = conditional_mlp_ref(traj_b, ctx_b, params,
                                   compute_dtype=jnp.bfloat16)
    assert out_bf16.shape == (B_big, output_dim)
    assert jnp.allclose(out_bf16, ref_bf16, atol=2e-2, rtol=2e-2), "bf16 mismatch"

    print("KERNEL_OK")
</pallas_src>

<mosaic_0001>
module attributes {stable_mosaic.version = 11 : i64} {
  func.func @_mlp_kernel(%arg0: i32, %arg1: memref<8x16xf32, #tpu.memory_space<vmem>>, %arg2: memref<8x8xf32, #tpu.memory_space<vmem>>, %arg3: memref<16x64xf32, #tpu.memory_space<vmem>>, %arg4: memref<8x64xf32, #tpu.memory_space<vmem>>, %arg5: memref<1x64xf32, #tpu.memory_space<vmem>>, %arg6: memref<64x64xf32, #tpu.memory_space<vmem>>, %arg7: memref<1x64xf32, #tpu.memory_space<vmem>>, %arg8: memref<64x32xf32, #tpu.memory_space<vmem>>, %arg9: memref<1x32xf32, #tpu.memory_space<vmem>>, %arg10: memref<8x32xf32, #tpu.memory_space<vmem>>) attributes {dimension_semantics = [#tpu.dimension_semantics<parallel>], iteration_bounds = array<i64: 1>, scalar_prefetch = 0 : i64, scratch_operands = 0 : i64, tpu.core_type = #tpu.core_type<tc>, window_params = [{transform_indices = @transform_0, window_bounds = array<i64: 8, 16>}, {transform_indices = @transform_1, window_bounds = array<i64: 8, 8>}, {pipeline_mode = #tpu.pipeline_mode<synchronous>, transform_indices = @transform_2, window_bounds = array<i64: 16, 64>}, {pipeline_mode = #tpu.pipeline_mode<synchronous>, transform_indices = @transform_3, window_bounds = array<i64: 8, 64>}, {pipeline_mode = #tpu.pipeline_mode<synchronous>, transform_indices = @transform_4, window_bounds = array<i64: 1, 64>}, {pipeline_mode = #tpu.pipeline_mode<synchronous>, transform_indices = @transform_5, window_bounds = array<i64: 64, 64>}, {pipeline_mode = #tpu.pipeline_mode<synchronous>, transform_indices = @transform_6, window_bounds = array<i64: 1, 64>}, {pipeline_mode = #tpu.pipeline_mode<synchronous>, transform_indices = @transform_7, window_bounds = array<i64: 64, 32>}, {pipeline_mode = #tpu.pipeline_mode<synchronous>, transform_indices = @transform_8, window_bounds = array<i64: 1, 32>}, {transform_indices = @transform_9, window_bounds = array<i64: 8, 32>}]} {
    %c0 = arith.constant 0 : index
    %c0_0 = arith.constant 0 : index
    %0 = vector.load %arg1[%c0, %c0_0] : memref<8x16xf32, #tpu.memory_space<vmem>>, vector<8x16xf32>
    %c0_1 = arith.constant 0 : index
    %c0_2 = arith.constant 0 : index
    %1 = vector.load %arg3[%c0_1, %c0_2] : memref<16x64xf32, #tpu.memory_space<vmem>>, vector<16x64xf32>
    %cst = arith.constant dense<0.000000e+00> : vector<8x64xf32>
    %2 = tpu.matmul %0, %1, %cst {dimension_numbers = #tpu.dot_dimension_numbers<[1], [0], [0], [1], [0, 0, 1, 1], [], []>} : vector<8x16xf32>, vector<16x64xf32>, vector<8x64xf32> -> vector<8x64xf32>
    %c0_3 = arith.constant 0 : index
    %c0_4 = arith.constant 0 : index
    %3 = vector.load %arg2[%c0_3, %c0_4] : memref<8x8xf32, #tpu.memory_space<vmem>>, vector<8x8xf32>
    %c0_5 = arith.constant 0 : index
    %c0_6 = arith.constant 0 : index
    %4 = vector.load %arg4[%c0_5, %c0_6] : memref<8x64xf32, #tpu.memory_space<vmem>>, vector<8x64xf32>
    %cst_7 = arith.constant dense<0.000000e+00> : vector<8x64xf32>
    %5 = tpu.matmul %3, %4, %cst_7 {dimension_numbers = #tpu.dot_dimension_numbers<[1], [0], [0], [1], [0, 0, 1, 1], [], []>} : vector<8x8xf32>, vector<8x64xf32>, vector<8x64xf32> -> vector<8x64xf32>
    %6 = arith.addf %2, %5 : vector<8x64xf32>
    %c0_8 = arith.constant 0 : index
    %c0_9 = arith.constant 0 : index
    %7 = vector.load %arg5[%c0_8, %c0_9] : memref<1x64xf32, #tpu.memory_space<vmem>>, vector<1x64xf32>
    %8 = vector.broadcast %7 : vector<1x64xf32> to vector<8x64xf32>
    %9 = arith.addf %6, %8 : vector<8x64xf32>
    %cst_10 = arith.constant 0.000000e+00 : f32
    %10 = vector.broadcast %cst_10 : f32 to vector<8x64xf32>
    %11 = arith.maximumf %9, %10 : vector<8x64xf32>
    %c0_11 = arith.constant 0 : index
    %c0_12 = arith.constant 0 : index
    %12 = vector.load %arg6[%c0_11, %c0_12] : memref<64x64xf32, #tpu.memory_space<vmem>>, vector<64x64xf32>
    %cst_13 = arith.constant dense<0.000000e+00> : vector<8x64xf32>
    %13 = tpu.matmul %11, %12, %cst_13 {dimension_numbers = #tpu.dot_dimension_numbers<[1], [0], [0], [1], [0, 0, 1, 1], [], []>} : vector<8x64xf32>, vector<64x64xf32>, vector<8x64xf32> -> vector<8x64xf32>
    %c0_14 = arith.constant 0 : index
    %c0_15 = arith.constant 0 : index
    %14 = vector.load %arg7[%c0_14, %c0_15] : memref<1x64xf32, #tpu.memory_space<vmem>>, vector<1x64xf32>
    %15 = vector.broadcast %14 : vector<1x64xf32> to vector<8x64xf32>
    %16 = arith.addf %13, %15 : vector<8x64xf32>
    %cst_16 = arith.constant 0.000000e+00 : f32
    %17 = vector.broadcast %cst_16 : f32 to vector<8x64xf32>
    %18 = arith.maximumf %16, %17 : vector<8x64xf32>
    %c0_17 = arith.constant 0 : index
    %c0_18 = arith.constant 0 : index
    %19 = vector.load %arg8[%c0_17, %c0_18] : memref<64x32xf32, #tpu.memory_space<vmem>>, vector<64x32xf32>
    %cst_19 = arith.constant dense<0.000000e+00> : vector<8x32xf32>
    %20 = tpu.matmul %18, %19, %cst_19 {dimension_numbers = #tpu.dot_dimension_numbers<[1], [0], [0], [1], [0, 0, 1, 1], [], []>} : vector<8x64xf32>, vector<64x32xf32>, vector<8x32xf32> -> vector<8x32xf32>
    %c0_20 = arith.constant 0 : index
    %c0_21 = arith.constant 0 : index
    %21 = vector.load %arg9[%c0_20, %c0_21] : memref<1x32xf32, #tpu.memory_space<vmem>>, vector<1x32xf32>
    %22 = vector.broadcast %21 : vector<1x32xf32> to vector<8x32xf32>
    %23 = arith.addf %20, %22 : vector<8x32xf32>
    %c0_22 = arith.constant 0 : index
    %c0_23 = arith.constant 0 : index
    %24 = vector.load %arg10[%c0_22, %c0_23] : memref<8x32xf32, #tpu.memory_space<vmem>>, vector<8x32xf32>
    tpu.vector_store %arg10[%c0_22, %c0_23], %23 {strides = array<i32>} : memref<8x32xf32, #tpu.memory_space<vmem>>, vector<8x32xf32>,
    return
  }
  func.func @transform_0(%arg0: i32) -> (i32, i32) {
    %c0_i32 = arith.constant 0 : i32
    %c0_i32_0 = arith.constant 0 : i32
    return %arg0, %c0_i32 : i32, i32
  }
  func.func @transform_1(%arg0: i32) -> (i32, i32) {
    %c0_i32 = arith.constant 0 : i32
    %c0_i32_0 = arith.constant 0 : i32
    return %arg0, %c0_i32 : i32, i32
  }
  func.func @transform_2(%arg0: i32) -> (i32, i32) {
    %c0_i32 = arith.constant 0 : i32
    %c0_i32_0 = arith.constant 0 : i32
    %c0_i32_1 = arith.constant 0 : i32
    return %c0_i32, %c0_i32_0 : i32, i32
  }
  func.func @transform_3(%arg0: i32) -> (i32, i32) {
    %c0_i32 = arith.constant 0 : i32
    %c0_i32_0 = arith.constant 0 : i32
    %c0_i32_1 = arith.constant 0 : i32
    return %c0_i32, %c0_i32_0 : i32, i32
  }
  func.func @transform_4(%arg0: i32) -> (i32, i32) {
    %c0_i32 = arith.constant 0 : i32
    %c0_i32_0 = arith.constant 0 : i32
    %c0_i32_1 = arith.constant 0 : i32
    return %c0_i32, %c0_i32_0 : i32, i32
  }
  func.func @transform_5(%arg0: i32) -> (i32, i32) {
    %c0_i32 = arith.constant 0 : i32
    %c0_i32_0 = arith.constant 0 : i32
    %c0_i32_1 = arith.constant 0 : i32
    return %c0_i32, %c0_i32_0 : i32, i32
  }
  func.func @transform_6(%arg0: i32) -> (i32, i32) {
    %c0_i32 = arith.constant 0 : i32
    %c0_i32_0 = arith.constant 0 : i32
    %c0_i32_1 = arith.constant 0 : i32
    return %c0_i32, %c0_i32_0 : i32, i32
  }
  func.func @transform_7(%arg0: i32) -> (i32, i32) {
    %c0_i32 = arith.constant 0 : i32
    %c0_i32_0 = arith.constant 0 : i32
    %c0_i32_1 = arith.constant 0 : i32
    return %c0_i32, %c0_i32_0 : i32, i32
  }
  func.func @transform_8(%arg0: i32) -> (i32, i32) {
    %c0_i32 = arith.constant 0 : i32
    %c0_i32_0 = arith.constant 0 : i32
    %c0_i32_1 = arith.constant 0 : i32
    return %c0_i32, %c0_i32_0 : i32, i32
  }
  func.func @transform_9(%arg0: i32) -> (i32, i32) {
    %c0_i32 = arith.constant 0 : i32
    %c0_i32_0 = arith.constant 0 : i32
    return %arg0, %c0_i32 : i32, i32
  }
}

</mosaic_0001>

<llo_original>
// kernel: conditional_mlp_pallas.1
$region0: #{conditional_mlp_pallas.1}
  #allocation0 [shape = 'u32[]', space=smem, size = 0x4, offset = 0x4, fixed_abs, tag = 'smem constant byte address 0x4 - core index']
  #allocation1 [shape = 'u32[144,128]{1,0:T(1,128)}', space=vmem, size = 0x12000, scoped, tag = 'internal scratch']
  %s0 = inlined_call_operand.vmem [shape: f32[8,16], index: 0, kind: input, shape index: {}]
  %s1 = inlined_call_operand.vmem [shape: f32[8,8], index: 1, kind: input, shape index: {}]
  %s2 = inlined_call_operand.vmem [shape: f32[16,64], index: 2, kind: input, shape index: {}]
  %s3 = inlined_call_operand.vmem [shape: f32[8,64], index: 3, kind: input, shape index: {}]
  %s4 = inlined_call_operand.vmem [shape: f32[1,64], index: 4, kind: input, shape index: {}]
  %s5 = inlined_call_operand.vmem [shape: f32[64,64], index: 5, kind: input, shape index: {}]
  %s6 = inlined_call_operand.vmem [shape: f32[1,64], index: 6, kind: input, shape index: {}]
  %s7 = inlined_call_operand.vmem [shape: f32[64,32], index: 7, kind: input, shape index: {}]
  %s8 = inlined_call_operand.vmem [shape: f32[1,32], index: 8, kind: input, shape index: {}]
  %s9 = inlined_call_operand.hbm [shape: f32[8,32], index: 9, kind: output, shape index: {}]
  %s10 = sld [smem:[#allocation0]]
  $region46: #{conditional_mlp_pallas.1} parent=0
    _
  %s12 = ssub.s32 1, %s10
  %s13 = scalar_select 0, %s12, %s10
  $region1: #{conditional_mlp_pallas.1} parent=0
    #allocation2 [shape = 'u8[4096]{0}', space=vmem, size = 0x1000, scoped, tag = 'output window, operand 0, single buffered']
    #allocation3 [shape = 's32[1]{0}', space=sflag, size = 0x4, scoped, tag = 'scoped memory for conditional_mlp_pallas.1']
    %14 = vsyncpa [#allocation3], 0
    // Predicated region
    $region2: #{conditional_mlp_pallas.1} parent=1 // pred_check
      _
    $region3: #{conditional_mlp_pallas.1} parent=1 // pred_check_branch
      %16 = sbr.rel (0) target = $region5
    $region4: #{conditional_mlp_pallas.1} parent=1 // pred_region
      _
    $region5: #{conditional_mlp_pallas.1} parent=1 // pred_fallthru
      _
    // Predicated region
    $region6: #{conditional_mlp_pallas.1} parent=1 // pred_check
      _
    $region7: #{conditional_mlp_pallas.1} parent=1 // pred_check_branch
      %18 = sbr.rel (0) target = $region9
    $region8: #{conditional_mlp_pallas.1} parent=1 // pred_region
      _
    $region9: #{conditional_mlp_pallas.1} parent=1 // pred_fallthru
      _
    // Predicated region
    $region10: #{conditional_mlp_pallas.1} parent=1 // pred_check
      _
    $region11: #{conditional_mlp_pallas.1} parent=1 // pred_check_branch
      %20 = sbr.rel (0) target = $region13
    $region12: #{conditional_mlp_pallas.1} parent=1 // pred_region
      _
    $region13: #{conditional_mlp_pallas.1} parent=1 // pred_fallthru
      _
    // Predicated region
    $region14: #{conditional_mlp_pallas.1} parent=1 // pred_check
      _
    $region15: #{conditional_mlp_pallas.1} parent=1 // pred_check_branch
      %22 = sbr.rel (0) target = $region17
    $region16: #{conditional_mlp_pallas.1} parent=1 // pred_region
      _
    $region17: #{conditional_mlp_pallas.1} parent=1 // pred_fallthru
      _
    // Predicated region
    $region18: #{conditional_mlp_pallas.1} parent=1 // pred_check
      _
    $region19: #{conditional_mlp_pallas.1} parent=1 // pred_check_branch
      %24 = sbr.rel (0) target = $region21
    $region20: #{conditional_mlp_pallas.1} parent=1 // pred_region
      _
    $region21: #{conditional_mlp_pallas.1} parent=1 // pred_fallthru
      _
    // Predicated region
    $region22: #{conditional_mlp_pallas.1} parent=1 // pred_check
      _
    $region23: #{conditional_mlp_pallas.1} parent=1 // pred_check_branch
      %26 = sbr.rel (0) target = $region25
    $region24: #{conditional_mlp_pallas.1} parent=1 // pred_region
      _
    $region25: #{conditional_mlp_pallas.1} parent=1 // pred_fallthru
      _
    // Predicated region
    $region26: #{conditional_mlp_pallas.1} parent=1 // pred_check
      _
    $region27: #{conditional_mlp_pallas.1} parent=1 // pred_check_branch
      %28 = sbr.rel (0) target = $region29
    $region28: #{conditional_mlp_pallas.1} parent=1 // pred_region
      _
    $region29: #{conditional_mlp_pallas.1} parent=1 // pred_fallthru
      _
    // Predicated region
    $region30: #{conditional_mlp_pallas.1} parent=1 // pred_check
      _
    $region31: #{conditional_mlp_pallas.1} parent=1 // pred_check_branch
      %30 = sbr.rel (0) target = $region33
    $region32: #{conditional_mlp_pallas.1} parent=1 // pred_region
      _
    $region33: #{conditional_mlp_pallas.1} parent=1 // pred_fallthru
      _
    // Predicated region
    $region34: #{conditional_mlp_pallas.1} parent=1 // pred_check
      _
    $region35: #{conditional_mlp_pallas.1} parent=1 // pred_check_branch
      %32 = sbr.rel (0) target = $region37
    $region36: #{conditional_mlp_pallas.1} parent=1 // pred_region
      _
    $region37: #{conditional_mlp_pallas.1} parent=1 // pred_fallthru
      _
    %v33 = vld [vmem:[%s0] sm:$0xff]
    %v34 = vld [vmem:[%s2] sm:$0xff]
    %v35 = vld [vmem:[%s2 + $0x8] sm:$0xff]
    %v36 = vld [vmem:[%s1] sm:$0xff]
    %v37 = vld [vmem:[%s3] sm:$0xff]
    %vm38 = vcmask 64512
    %v40 = vsel %vm38, %v36, 0
    %42 = vmatprep.subr.mxu0 0.0
    %43 = vmatpush1.msra.mxu0 0.0
    %44 = vmatprep.subr.mxu0 0.0
    %45 = vmatpush1.msra.mxu0 0.0
    %46 = vmatprep.subr.mxu0 0.0
    %47 = vmatpush1.msra.mxu0 0.0
    %48 = vmatprep.subr.mxu0 0.0
    %49 = vmatpush1.msra.mxu0 0.0
    %50 = vmatprep.subr.mxu0 0.0
    %51 = vmatpush1.msra.mxu0 0.0
    %52 = vmatprep.subr.mxu0 0.0
    %53 = vmatpush1.msra.mxu0 0.0
    %54 = vmatprep.subr.mxu0 0.0
    %55 = vmatpush1.msra.mxu0 0.0
    %56 = vmatprep.subr.mxu0 0.0
    %57 = vmatpush1.msra.mxu0 0.0
    %58 = vmatprep.subr.mxu0 0.0
    %59 = vmatpush1.msra.mxu0 0.0
    %60 = vmatprep.subr.mxu0 0.0
    %61 = vmatpush1.msra.mxu0 0.0
    %62 = vmatprep.subr.mxu0 0.0
    %63 = vmatpush1.msra.mxu0 0.0
    %64 = vmatprep.subr.mxu0 0.0
    %65 = vmatpush1.msra.mxu0 0.0
    %66 = vmatprep.subr.mxu0 0.0
    %67 = vmatpush1.msra.mxu0 0.0
    %68 = vmatprep.subr.mxu0 0.0
    %69 = vmatpush1.msra.mxu0 0.0
    %70 = vmatprep.subr.mxu0 0.0
    %71 = vmatpush1.msra.mxu0 0.0
    %72 = vmatprep.subr.mxu0 0.0
    %73 = vmatpush1.msra.mxu0 %v37
    %74 = vmatprep.subr.mxu0 0.0
    %75 = vmatpush2.msra.mxu0 0.0
    %76 = vmatprep.subr.mxu0 0.0
    %77 = vmatpush2.msra.mxu0 0.0
    %78 = vmatprep.subr.mxu0 0.0
    %79 = vmatpush2.msra.mxu0 0.0
    %80 = vmatprep.subr.mxu0 0.0
    %81 = vmatpush2.msra.mxu0 0.0
    %82 = vmatprep.subr.mxu0 0.0
    %83 = vmatpush2.msra.mxu0 0.0
    %84 = vmatprep.subr.mxu0 0.0
    %85 = vmatpush2.msra.mxu0 0.0
    %86 = vmatprep.subr.mxu0 0.0
    %87 = vmatpush2.msra.mxu0 0.0
    %88 = vmatprep.subr.mxu0 0.0
    %89 = vmatpush2.msra.mxu0 0.0
    %90 = vmatprep.subr.mxu0 0.0
    %91 = vmatpush2.msra.mxu0 0.0
    %92 = vmatprep.subr.mxu0 0.0
    %93 = vmatpush2.msra.mxu0 0.0
    %94 = vmatprep.subr.mxu0 0.0
    %95 = vmatpush2.msra.mxu0 0.0
    %96 = vmatprep.subr.mxu0 0.0
    %97 = vmatpush2.msra.mxu0 0.0
    %98 = vmatprep.subr.mxu0 0.0
    %99 = vmatpush2.msra.mxu0 0.0
    %100 = vmatprep.subr.mxu0 0.0
    %101 = vmatpush2.msra.mxu0 0.0
    %102 = vmatprep.subr.mxu0 0.0
    %103 = vmatpush2.msra.mxu0 0.0
    %104 = vmatprep.subr.mxu0 0.0
    %105 = vmatpush2.msra.mxu0 0.0
    %106 = vmatprep.mubr.f32.mxu0 0.0
    %107 = vmatmul.mubr.f32.gmra.mxu0 %v40
    %v108 = vpop.f32.mrf.mxu0
    %v109 = vadd.f32 0.0, %v108
    %v110 = vpop.f32.mrf.mxu0
    %111 = vdwg.mxu0
    %vm112 = vcmask 130048
    %v114 = vsel %vm112, %v33, 0
    %116 = vmatprep.subr.mxu0 0.0
    %117 = vmatpush1.msra.mxu0 0.0
    %118 = vmatprep.subr.mxu0 0.0
    %119 = vmatpush1.msra.mxu0 0.0
    %120 = vmatprep.subr.mxu0 0.0
    %121 = vmatpush1.msra.mxu0 0.0
    %122 = vmatprep.subr.mxu0 0.0
    %123 = vmatpush1.msra.mxu0 0.0
    %124 = vmatprep.subr.mxu0 0.0
    %125 = vmatpush1.msra.mxu0 0.0
    %126 = vmatprep.subr.mxu0 0.0
    %127 = vmatpush1.msra.mxu0 0.0
    %128 = vmatprep.subr.mxu0 0.0
    %129 = vmatpush1.msra.mxu0 0.0
    %130 = vmatprep.subr.mxu0 0.0
    %131 = vmatpush1.msra.mxu0 0.0
    %132 = vmatprep.subr.mxu0 0.0
    %133 = vmatpush1.msra.mxu0 0.0
    %134 = vmatprep.subr.mxu0 0.0
    %135 = vmatpush1.msra.mxu0 0.0
    %136 = vmatprep.subr.mxu0 0.0
    %137 = vmatpush1.msra.mxu0 0.0
    %138 = vmatprep.subr.mxu0 0.0
    %139 = vmatpush1.msra.mxu0 0.0
    %140 = vmatprep.subr.mxu0 0.0
    %141 = vmatpush1.msra.mxu0 0.0
    %142 = vmatprep.subr.mxu0 0.0
    %143 = vmatpush1.msra.mxu0 0.0
    %144 = vmatprep.subr.mxu0 0.0
    %145 = vmatpush1.msra.mxu0 %v35
    %146 = vmatprep.subr.mxu0 0.0
    %147 = vmatpush1.msra.mxu0 %v34
    %148 = vmatprep.subr.mxu0 0.0
    %149 = vmatpush2.msra.mxu0 0.0
    %150 = vmatprep.subr.mxu0 0.0
    %151 = vmatpush2.msra.mxu0 0.0
    %152 = vmatprep.subr.mxu0 0.0
    %153 = vmatpush2.msra.mxu0 0.0
    %154 = vmatprep.subr.mxu0 0.0
    %155 = vmatpush2.msra.mxu0 0.0
    %156 = vmatprep.subr.mxu0 0.0
    %157 = vmatpush2.msra.mxu0 0.0
    %158 = vmatprep.subr.mxu0 0.0
    %159 = vmatpush2.msra.mxu0 0.0
    %160 = vmatprep.subr.mxu0 0.0
    %161 = vmatpush2.msra.mxu0 0.0
    %162 = vmatprep.subr.mxu0 0.0
    %163 = vmatpush2.msra.mxu0 0.0
    %164 = vmatprep.subr.mxu0 0.0
    %165 = vmatpush2.msra.mxu0 0.0
    %166 = vmatprep.subr.mxu0 0.0
    %167 = vmatpush2.msra.mxu0 0.0
    %168 = vmatprep.subr.mxu0 0.0
    %169 = vmatpush2.msra.mxu0 0.0
    %170 = vmatprep.subr.mxu0 0.0
    %171 = vmatpush2.msra.mxu0 0.0
    %172 = vmatprep.subr.mxu0 0.0
    %173 = vmatpush2.msra.mxu0 0.0
    %174 = vmatprep.subr.mxu0 0.0
    %175 = vmatpush2.msra.mxu0 0.0
    %176 = vmatprep.subr.mxu0 0.0
    %177 = vmatpush2.msra.mxu0 0.0
    %178 = vmatprep.subr.mxu0 0.0
    %179 = vmatpush2.msra.mxu0 0.0
    %180 = vmatprep.mubr.f32.mxu0 0.0
    %181 = vmatmul.mubr.f32.gmra.mxu0 %v114
    %v182 = vpop.f32.mrf.mxu0
    %v183 = vadd.f32 %v109, %v182
    %v184 = vpop.f32.mrf.mxu0
    %185 = vdwg.mxu0
    %v186 = vld [vmem:[%s4] sm:$0x1]
    %v188 = vlaneseq
    %v189 = vshrl.u32 %v188, 7
    %v190 = vsub.s32 0, %v189
    %v191 = vrot.slane %v186, %v190
    %v193 = vadd.f32 %v183, %v191
    %v194 = vmax.f32 %v193, 0.0
    %v195 = vld [vmem:[%s5] sm:$0xff]
    %v196 = vld [vmem:[%s5 + $0x8] sm:$0xff]
    %v197 = vld [vmem:[%s5 + $0x10] sm:$0xff]
    %v198 = vld [vmem:[%s5 + $0x18] sm:$0xff]
    %v199 = vld [vmem:[%s5 + $0x20] sm:$0xff]
    %v200 = vld [vmem:[%s5 + $0x28] sm:$0xff]
    %v201 = vld [vmem:[%s5 + $0x30] sm:$0xff]
    %v202 = vld [vmem:[%s5 + $0x38] sm:$0xff]
    %v203 = vld [vmem:[%s6] sm:$0x1]
    %v205 = vlaneseq
    %v206 = vshrl.u32 %v205, 7
    %v207 = vsub.s32 0, %v206
    %v208 = vrot.slane %v203, %v207
    %vm210 = vcmask 523264
    %v212 = vsel %vm210, %v194, 0
    %214 = vmatprep.subr.mxu0 0.0
    %215 = vmatpush1.msra.mxu0 0.0
    %216 = vmatprep.subr.mxu0 0.0
    %217 = vmatpush1.msra.mxu0 0.0
    %218 = vmatprep.subr.mxu0 0.0
    %219 = vmatpush1.msra.mxu0 0.0
    %220 = vmatprep.subr.mxu0 0.0
    %221 = vmatpush1.msra.mxu0 0.0
    %222 = vmatprep.subr.mxu0 0.0
    %223 = vmatpush1.msra.mxu0 0.0
    %224 = vmatprep.subr.mxu0 0.0
    %225 = vmatpush1.msra.mxu0 0.0
    %226 = vmatprep.subr.mxu0 0.0
    %227 = vmatpush1.msra.mxu0 0.0
    %228 = vmatprep.subr.mxu0 0.0
    %229 = vmatpush1.msra.mxu0 0.0
    %230 = vmatprep.subr.mxu0 0.0
    %231 = vmatpush1.msra.mxu0 %v202
    %232 = vmatprep.subr.mxu0 0.0
    %233 = vmatpush1.msra.mxu0 %v201
    %234 = vmatprep.subr.mxu0 0.0
    %235 = vmatpush1.msra.mxu0 %v200
    %236 = vmatprep.subr.mxu0 0.0
    %237 = vmatpush1.msra.mxu0 %v199
    %238 = vmatprep.subr.mxu0 0.0
    %239 = vmatpush1.msra.mxu0 %v198
    %240 = vmatprep.subr.mxu0 0.0
    %241 = vmatpush1.msra.mxu0 %v197
    %242 = vmatprep.subr.mxu0 0.0
    %243 = vmatpush1.msra.mxu0 %v196
    %244 = vmatprep.subr.mxu0 0.0
    %245 = vmatpush1.msra.mxu0 %v195
    %246 = vmatprep.subr.mxu0 0.0
    %247 = vmatpush2.msra.mxu0 0.0
    %248 = vmatprep.subr.mxu0 0.0
    %249 = vmatpush2.msra.mxu0 0.0
    %250 = vmatprep.subr.mxu0 0.0
    %251 = vmatpush2.msra.mxu0 0.0
    %252 = vmatprep.subr.mxu0 0.0
    %253 = vmatpush2.msra.mxu0 0.0
    %254 = vmatprep.subr.mxu0 0.0
    %255 = vmatpush2.msra.mxu0 0.0
    %256 = vmatprep.subr.mxu0 0.0
    %257 = vmatpush2.msra.mxu0 0.0
    %258 = vmatprep.subr.mxu0 0.0
    %259 = vmatpush2.msra.mxu0 0.0
    %260 = vmatprep.subr.mxu0 0.0
    %261 = vmatpush2.msra.mxu0 0.0
    %262 = vmatprep.subr.mxu0 0.0
    %263 = vmatpush2.msra.mxu0 0.0
    %264 = vmatprep.subr.mxu0 0.0
    %265 = vmatpush2.msra.mxu0 0.0
    %266 = vmatprep.subr.mxu0 0.0
    %267 = vmatpush2.msra.mxu0 0.0
    %268 = vmatprep.subr.mxu0 0.0
    %269 = vmatpush2.msra.mxu0 0.0
    %270 = vmatprep.subr.mxu0 0.0
    %271 = vmatpush2.msra.mxu0 0.0
    %272 = vmatprep.subr.mxu0 0.0
    %273 = vmatpush2.msra.mxu0 0.0
    %274 = vmatprep.subr.mxu0 0.0
    %275 = vmatpush2.msra.mxu0 0.0
    %276 = vmatprep.subr.mxu0 0.0
    %277 = vmatpush2.msra.mxu0 0.0
    %278 = vmatprep.mubr.f32.mxu0 0.0
    %279 = vmatmul.mubr.f32.gmra.mxu0 %v212
    %v280 = vpop.f32.mrf.mxu0
    %v281 = vadd.f32 %v208, %v280
    %v282 = vpop.f32.mrf.mxu0
    %283 = vdwg.mxu0
    %v284 = vmax.f32 %v281, 0.0
    %v285 = vld [vmem:[%s7] sm:$0xff]
    %v286 = vld [vmem:[%s7 + $0x8] sm:$0xff]
    %v287 = vld [vmem:[%s7 + $0x10] sm:$0xff]
    %v288 = vld [vmem:[%s7 + $0x18] sm:$0xff]
    %v289 = vld [vmem:[%s7 + $0x20] sm:$0xff]
    %v290 = vld [vmem:[%s7 + $0x28] sm:$0xff]
    %v291 = vld [vmem:[%s7 + $0x30] sm:$0xff]
    %v292 = vld [vmem:[%s7 + $0x38] sm:$0xff]
    %v293 = vld [vmem:[%s8] sm:$0x1]
    %v295 = vlaneseq
    %v296 = vshrl.u32 %v295, 7
    %v297 = vsub.s32 0, %v296
    %v298 = vrot.slane %v293, %v297
    %v301 = vsel %vm210, %v284, 0
    %303 = vmatprep.subr.mxu0 0.0
    %304 = vmatpush1.msra.mxu0 0.0
    %305 = vmatprep.subr.mxu0 0.0
    %306 = vmatpush1.msra.mxu0 0.0
    %307 = vmatprep.subr.mxu0 0.0
    %308 = vmatpush1.msra.mxu0 0.0
    %309 = vmatprep.subr.mxu0 0.0
    %310 = vmatpush1.msra.mxu0 0.0
    %311 = vmatprep.subr.mxu0 0.0
    %312 = vmatpush1.msra.mxu0 0.0
    %313 = vmatprep.subr.mxu0 0.0
    %314 = vmatpush1.msra.mxu0 0.0
    %315 = vmatprep.subr.mxu0 0.0
    %316 = vmatpush1.msra.mxu0 0.0
    %317 = vmatprep.subr.mxu0 0.0
    %318 = vmatpush1.msra.mxu0 0.0
    %319 = vmatprep.subr.mxu0 0.0
    %320 = vmatpush1.msra.mxu0 %v292
    %321 = vmatprep.subr.mxu0 0.0
    %322 = vmatpush1.msra.mxu0 %v291
    %323 = vmatprep.subr.mxu0 0.0
    %324 = vmatpush1.msra.mxu0 %v290
    %325 = vmatprep.subr.mxu0 0.0
    %326 = vmatpush1.msra.mxu0 %v289
    %327 = vmatprep.subr.mxu0 0.0
    %328 = vmatpush1.msra.mxu0 %v288
    %329 = vmatprep.subr.mxu0 0.0
    %330 = vmatpush1.msra.mxu0 %v287
    %331 = vmatprep.subr.mxu0 0.0
    %332 = vmatpush1.msra.mxu0 %v286
    %333 = vmatprep.subr.mxu0 0.0
    %334 = vmatpush1.msra.mxu0 %v285
    %335 = vmatprep.subr.mxu0 0.0
    %336 = vmatpush2.msra.mxu0 0.0
    %337 = vmatprep.subr.mxu0 0.0
    %338 = vmatpush2.msra.mxu0 0.0
    %339 = vmatprep.subr.mxu0 0.0
    %340 = vmatpush2.msra.mxu0 0.0
    %341 = vmatprep.subr.mxu0 0.0
    %342 = vmatpush2.msra.mxu0 0.0
    %343 = vmatprep.subr.mxu0 0.0
    %344 = vmatpush2.msra.mxu0 0.0
    %345 = vmatprep.subr.mxu0 0.0
    %346 = vmatpush2.msra.mxu0 0.0
    %347 = vmatprep.subr.mxu0 0.0
    %348 = vmatpush2.msra.mxu0 0.0
    %349 = vmatprep.subr.mxu0 0.0
    %350 = vmatpush2.msra.mxu0 0.0
    %351 = vmatprep.subr.mxu0 0.0
    %352 = vmatpush2.msra.mxu0 0.0
    %353 = vmatprep.subr.mxu0 0.0
    %354 = vmatpush2.msra.mxu0 0.0
    %355 = vmatprep.subr.mxu0 0.0
    %356 = vmatpush2.msra.mxu0 0.0
    %357 = vmatprep.subr.mxu0 0.0
    %358 = vmatpush2.msra.mxu0 0.0
    %359 = vmatprep.subr.mxu0 0.0
    %360 = vmatpush2.msra.mxu0 0.0
    %361 = vmatprep.subr.mxu0 0.0
    %362 = vmatpush2.msra.mxu0 0.0
    %363 = vmatprep.subr.mxu0 0.0
    %364 = vmatpush2.msra.mxu0 0.0
    %365 = vmatprep.subr.mxu0 0.0
    %366 = vmatpush2.msra.mxu0 0.0
    %367 = vmatprep.mubr.f32.mxu0 0.0
    %368 = vmatmul.mubr.f32.gmra.mxu0 %v301
    %v369 = vpop.f32.mrf.mxu0
    %v370 = vadd.f32 %v298, %v369
    %v371 = vpop.f32.mrf.mxu0
    %372 = vdwg.mxu0
    %vm373 = vcmask 261120
    %374 = vst.msk [vmem:[#allocation2] sm:$0xff] %vm373, %v370
    // Predicated region
    $region38: #{conditional_mlp_pallas.1} parent=1 // pred_check
      _
    $region39: #{conditional_mlp_pallas.1} parent=1 // pred_check_branch
      %376 = sbr.rel (0) target = $region41
    $region40: #{conditional_mlp_pallas.1} parent=1 // pred_region
      %s378 = ssub.s32 128, 128
      %379 = vsyncadd [#allocation3], %s378
      %s381 = sshll.u32 [#allocation2], 4
      %s382 = int_to_ptr.vmem [resolvable:$true] %s381
      %384 = dma.vmem_to_hbm [thread:$0]  %s382, 128, %s9, [#allocation3]
    $region41: #{conditional_mlp_pallas.1} parent=1 // pred_fallthru
      _
    // Predicated region
    $region42: #{conditional_mlp_pallas.1} parent=1 // pred_check
      _
    $region43: #{conditional_mlp_pallas.1} parent=1 // pred_check_branch
      %386 = sbr.rel (0) target = $region45
    $region44: #{conditional_mlp_pallas.1} parent=1 // pred_region
      %387 = dma.done [#allocation3], 128
    $region45: #{conditional_mlp_pallas.1} parent=1 // pred_fallthru
      _
    %388 = vsyncpa [#allocation3], 1

</llo_original>
